<compile_context>
chip_gen: v5e
topology: v5e:2x2
jax: 0.10.0
libtpu: 0.0.40
codegen_flags: <defaults>
</compile_context>

<pallas_src>
import functools

import jax
import jax.numpy as jnp
from jax import lax
from jax.experimental import pallas as pl
from jax.experimental.pallas import tpu as pltpu

_K = 3  # number of smallest target_ema entries selected per row


def _soft_loss_kernel(inp_ref, tgt_ref, out_ref, *, batch_total, block_rows, k=_K):
    i = pl.program_id(0)

    x = inp_ref[...].astype(jnp.float32)       # (tb, C) logits
    t = tgt_ref[...].astype(jnp.float32)       # (tb, C) ema targets

    # ---- stable log-softmax normalizer per row --------------------------------
    m = jnp.max(x, axis=-1, keepdims=True)
    lse = m + jnp.log(jnp.sum(jnp.exp(x - m), axis=-1, keepdims=True))   # (tb, 1)

    # ---- k smallest target values per row (first lane wins exact ties) --------
    # Loop-invariant full-width constants hoisted out of the unrolled k-loop
    # (JAX does not CSE broadcast_in_dim).
    C = t.shape[-1]
    lane = lax.broadcasted_iota(jnp.int32, t.shape, 1)
    inf_full = jnp.full(t.shape, jnp.inf, dtype=jnp.float32)
    lane_sentinel = jnp.full(t.shape, jnp.int32(C), dtype=jnp.int32)

    work = t
    vals, picks = [], []
    for _ in range(k):                      # k is a tiny static constant: unrolled
        mn = jnp.min(work, axis=-1, keepdims=True)        # selected value   (tb, 1)
        cand = jnp.where(work == mn, lane, lane_sentinel)
        first = jnp.min(cand, axis=-1, keepdims=True)     # first tied lane  (tb, 1)
        pick = lane == first                              # exactly one-hot  (tb, C)
        vals.append(mn)
        picks.append(pick)
        work = jnp.where(pick, inf_full, work)

    # ---- softmax over the k selected values: (tb, 1) tensors only -------------
    m3 = vals[0]
    for v in vals[1:]:
        m3 = jnp.maximum(m3, v)
    es = [jnp.exp(v - m3) for v in vals]
    denom = es[0]
    for e in es[1:]:
        denom = denom + e
    inv = pl.reciprocal(denom, approx=False)
    ws = [e * inv for e in es]                            # per-row weights, sum to 1

    # ---- scatter weights onto picked lanes; ONE weighted lane reduction -------
    wsel = jnp.where(picks[0], ws[0], 0.0)
    for pk, wk in zip(picks[1:], ws[1:]):
        wsel = wsel + jnp.where(pk, wk, 0.0)
    dot = jnp.sum(wsel * x, axis=-1, keepdims=True)       # (tb, 1)
    # weights sum to 1 per row, so sum_c w * (lse - x) == lse - dot
    row = lse - dot

    # ---- mask remainder rows of the (possibly partial) last block -------------
    row_ids = i * block_rows + lax.broadcasted_iota(jnp.int32, row.shape, 0)
    row = jnp.where(row_ids < batch_total, row, jnp.zeros_like(row))

    # ---- per-block partial of the batch mean (finished with a tiny JAX sum) ---
    blk = jnp.sum(row, axis=0, keepdims=True) * jnp.float32(1.0 / batch_total)  # (1,1)
    out_ref[...] = jnp.broadcast_to(blk[None], out_ref.shape)   # lane-dense store


def _round_up(x, m):
    return (x + m - 1) // m * m


def soft_target_loss(inputs, target_ema, *, tb=None, vmem_budget_bytes=12 << 20):
    """Batch-mean soft cross-entropy against softmax of the 3 smallest EMA targets."""
    B, C = inputs.shape
    assert target_ema.shape == (B, C)
    assert C >= _K

    # Batch-tile sizing: amortize the ~0.35 us per-grid-step overhead with large
    # tiles, but keep (2 inputs x 2 pipeline buffers + ~8 live full-width temps)
    # under the scoped-VMEM budget so it fits the default limit on v5e/v6e/v7x.
    per_row_bytes = (2 * 2 + 8) * C * 4
    tb_cap = max(8, (vmem_budget_bytes // per_row_bytes) // 8 * 8)
    if tb is None:
        tb = 1024
    tb = max(8, min(int(tb), tb_cap, _round_up(B, 8)))
    tb = max(8, (tb // 8) * 8)
    # TODO(synk): very large class counts need a class-tiled two-pass formulation
    # for the top-k and the log-sum-exp; this kernel keeps the full class axis
    # resident in a single VMEM block.
    assert per_row_bytes * tb <= (14 << 20), "class axis too large for one VMEM block"

    num_blocks = pl.cdiv(B, tb)
    kernel = functools.partial(_soft_loss_kernel, batch_total=B, block_rows=tb)

    partials = pl.pallas_call(
        kernel,
        out_shape=jax.ShapeDtypeStruct((num_blocks, 1, 128), jnp.float32),
        grid_spec=pltpu.PrefetchScalarGridSpec(
            num_scalar_prefetch=0,
            grid=(num_blocks,),
            in_specs=[
                pl.BlockSpec((tb, C), lambda i: (i, 0)),
                pl.BlockSpec((tb, C), lambda i: (i, 0)),
            ],
            # Per-block partials (no resident accumulator) so the grid axis can
            # be megacore-sharded on v7x; final reduction happens in plain JAX.
            out_specs=pl.BlockSpec((1, 1, 128), lambda i: (i, 0, 0)),
        ),
        compiler_params=pltpu.CompilerParams(
            dimension_semantics=("parallel",),
        ),
        cost_estimate=pl.CostEstimate(
            flops=int(30 * B * C),
            transcendentals=int(B * C),
            bytes_accessed=int(2 * B * C * inputs.dtype.itemsize + num_blocks * 128 * 4),
        ),
    )(inputs, target_ema)

    return jnp.sum(partials[:, 0, 0])


def _reference(inputs, target_ema):
    # Pure-JAX reference mirroring the PyTorch forward.
    neg_vals, idx = lax.top_k(-target_ema.astype(jnp.float32), _K)  # 3 smallest
    vals = -neg_vals
    w = jax.nn.softmax(vals, axis=1)                                # (B, 3)
    logp = jax.nn.log_softmax(inputs.astype(jnp.float32), axis=1)   # (B, C)
    gathered = jnp.take_along_axis(logp, idx, axis=1)               # (B, 3)
    return jnp.sum(jnp.mean(-gathered * w, axis=0))


if __name__ == "__main__":
    base_key = jax.random.PRNGKey(0)

    def _check(B, C, tb=None, tag=0):
        k1, k2 = jax.random.split(jax.random.fold_in(base_key, tag))
        inputs = jax.random.normal(k1, (B, C), dtype=jnp.float32)
        target_ema = jax.random.normal(k2, (B, C), dtype=jnp.float32)
        loss = jax.block_until_ready(soft_target_loss(inputs, target_ema, tb=tb))
        ref = _reference(inputs, target_ema)
        assert jnp.allclose(loss, ref, rtol=1e-5, atol=1e-5), (B, C, tb, loss, ref)

    _check(16, 128, tag=0)           # single block
    _check(20, 128, tag=1)           # remainder rows masked in the last block
    _check(48, 128, tb=16, tag=2)    # multiple blocks -> per-block parallel partials

    print("KERNEL_OK")
</pallas_src>

<mosaic_0001>
module attributes {stable_mosaic.version = 11 : i64} {
  func.func @_soft_loss_kernel(%arg0: i32, %arg1: memref<16x128xf32, #tpu.memory_space<vmem>>, %arg2: memref<16x128xf32, #tpu.memory_space<vmem>>, %arg3: memref<1x1x128xf32, #tpu.memory_space<vmem>>) attributes {dimension_semantics = [#tpu.dimension_semantics<parallel>], iteration_bounds = array<i64: 1>, scalar_prefetch = 0 : i64, scratch_operands = 0 : i64, tpu.core_type = #tpu.core_type<tc>, window_params = [{transform_indices = @transform_0, window_bounds = array<i64: 16, 128>}, {transform_indices = @transform_1, window_bounds = array<i64: 16, 128>}, {transform_indices = @transform_2, window_bounds = array<i64: 1, 1, 128>}]} {
    %c0 = arith.constant 0 : index
    %c0_0 = arith.constant 0 : index
    %0 = vector.load %arg1[%c0, %c0_0] : memref<16x128xf32, #tpu.memory_space<vmem>>, vector<16x128xf32>
    %c0_1 = arith.constant 0 : index
    %c0_2 = arith.constant 0 : index
    %1 = vector.load %arg2[%c0_1, %c0_2] : memref<16x128xf32, #tpu.memory_space<vmem>>, vector<16x128xf32>
    %cst = arith.constant dense<0xFF800000> : vector<16xf32>
    %2 = vector.multi_reduction <maximumf>, %0, %cst [1] : vector<16x128xf32> to vector<16xf32>
    %3 = vector.shape_cast %2 : vector<16xf32> to vector<16x1xf32>
    %4 = vector.broadcast %3 : vector<16x1xf32> to vector<16x128xf32>
    %5 = arith.subf %0, %4 : vector<16x128xf32>
    %6 = math.exp %5 : vector<16x128xf32>
    %cst_3 = arith.constant dense<0.000000e+00> : vector<16xf32>
    %7 = vector.multi_reduction <add>, %6, %cst_3 [1] : vector<16x128xf32> to vector<16xf32>
    %8 = vector.shape_cast %7 : vector<16xf32> to vector<16x1xf32>
    %9 = math.log %8 : vector<16x1xf32>
    %10 = arith.addf %3, %9 : vector<16x1xf32>
    %11 = tpu.iota {dimensions = array<i32: 1>} : vector<16x128xi32>
    %cst_4 = arith.constant 0x7F800000 : f32
    %12 = vector.broadcast %cst_4 : f32 to vector<16x128xf32>
    %c128_i32 = arith.constant 128 : i32
    %13 = vector.broadcast %c128_i32 : i32 to vector<16x128xi32>
    %cst_5 = arith.constant dense<0x7F800000> : vector<16xf32>
    %14 = vector.multi_reduction <minimumf>, %1, %cst_5 [1] : vector<16x128xf32> to vector<16xf32>
    %15 = vector.shape_cast %14 : vector<16xf32> to vector<16x1xf32>
    %16 = vector.broadcast %15 : vector<16x1xf32> to vector<16x128xf32>
    %17 = arith.cmpf oeq, %1, %16 : vector<16x128xf32>
    %18 = arith.select %17, %11, %13 : vector<16x128xi1>, vector<16x128xi32>
    %cst_6 = arith.constant dense<2147483647> : vector<16xi32>
    %19 = vector.multi_reduction <minsi>, %18, %cst_6 [1] : vector<16x128xi32> to vector<16xi32>
    %20 = vector.shape_cast %19 : vector<16xi32> to vector<16x1xi32>
    %21 = vector.broadcast %20 : vector<16x1xi32> to vector<16x128xi32>
    %22 = arith.cmpi eq, %11, %21 : vector<16x128xi32>
    %23 = arith.select %22, %12, %1 : vector<16x128xi1>, vector<16x128xf32>
    %cst_7 = arith.constant dense<0x7F800000> : vector<16xf32>
    %24 = vector.multi_reduction <minimumf>, %23, %cst_7 [1] : vector<16x128xf32> to vector<16xf32>
    %25 = vector.shape_cast %24 : vector<16xf32> to vector<16x1xf32>
    %26 = vector.broadcast %25 : vector<16x1xf32> to vector<16x128xf32>
    %27 = arith.cmpf oeq, %23, %26 : vector<16x128xf32>
    %28 = arith.select %27, %11, %13 : vector<16x128xi1>, vector<16x128xi32>
    %cst_8 = arith.constant dense<2147483647> : vector<16xi32>
    %29 = vector.multi_reduction <minsi>, %28, %cst_8 [1] : vector<16x128xi32> to vector<16xi32>
    %30 = vector.shape_cast %29 : vector<16xi32> to vector<16x1xi32>
    %31 = vector.broadcast %30 : vector<16x1xi32> to vector<16x128xi32>
    %32 = arith.cmpi eq, %11, %31 : vector<16x128xi32>
    %33 = arith.select %32, %12, %23 : vector<16x128xi1>, vector<16x128xf32>
    %cst_9 = arith.constant dense<0x7F800000> : vector<16xf32>
    %34 = vector.multi_reduction <minimumf>, %33, %cst_9 [1] : vector<16x128xf32> to vector<16xf32>
    %35 = vector.shape_cast %34 : vector<16xf32> to vector<16x1xf32>
    %36 = vector.broadcast %35 : vector<16x1xf32> to vector<16x128xf32>
    %37 = arith.cmpf oeq, %33, %36 : vector<16x128xf32>
    %38 = arith.select %37, %11, %13 : vector<16x128xi1>, vector<16x128xi32>
    %cst_10 = arith.constant dense<2147483647> : vector<16xi32>
    %39 = vector.multi_reduction <minsi>, %38, %cst_10 [1] : vector<16x128xi32> to vector<16xi32>
    %40 = vector.shape_cast %39 : vector<16xi32> to vector<16x1xi32>
    %41 = vector.broadcast %40 : vector<16x1xi32> to vector<16x128xi32>
    %42 = arith.cmpi eq, %11, %41 : vector<16x128xi32>
    %43 = arith.maximumf %15, %25 : vector<16x1xf32>
    %44 = arith.maximumf %43, %35 : vector<16x1xf32>
    %45 = arith.subf %15, %44 : vector<16x1xf32>
    %46 = math.exp %45 : vector<16x1xf32>
    %47 = arith.subf %25, %44 : vector<16x1xf32>
    %48 = math.exp %47 : vector<16x1xf32>
    %49 = arith.subf %35, %44 : vector<16x1xf32>
    %50 = math.exp %49 : vector<16x1xf32>
    %51 = arith.addf %46, %48 : vector<16x1xf32>
    %52 = arith.addf %51, %50 : vector<16x1xf32>
    %53 = tpu.reciprocal %52 : vector<16x1xf32> -> vector<16x1xf32>
    %54 = arith.mulf %46, %53 : vector<16x1xf32>
    %55 = arith.mulf %48, %53 : vector<16x1xf32>
    %56 = arith.mulf %50, %53 : vector<16x1xf32>
    %cst_11 = arith.constant 0.000000e+00 : f32
    %57 = vector.shape_cast %54 : vector<16x1xf32> to vector<16x1xf32>
    %58 = vector.broadcast %57 : vector<16x1xf32> to vector<16x128xf32>
    %59 = vector.broadcast %cst_11 : f32 to vector<16x128xf32>
    %60 = arith.select %22, %58, %59 : vector<16x128xi1>, vector<16x128xf32>
    %cst_12 = arith.constant 0.000000e+00 : f32
    %61 = vector.shape_cast %55 : vector<16x1xf32> to vector<16x1xf32>
    %62 = vector.broadcast %61 : vector<16x1xf32> to vector<16x128xf32>
    %63 = vector.broadcast %cst_12 : f32 to vector<16x128xf32>
    %64 = arith.select %32, %62, %63 : vector<16x128xi1>, vector<16x128xf32>
    %65 = arith.addf %60, %64 : vector<16x128xf32>
    %cst_13 = arith.constant 0.000000e+00 : f32
    %66 = vector.shape_cast %56 : vector<16x1xf32> to vector<16x1xf32>
    %67 = vector.broadcast %66 : vector<16x1xf32> to vector<16x128xf32>
    %68 = vector.broadcast %cst_13 : f32 to vector<16x128xf32>
    %69 = arith.select %42, %67, %68 : vector<16x128xi1>, vector<16x128xf32>
    %70 = arith.addf %65, %69 : vector<16x128xf32>
    %71 = arith.mulf %70, %0 : vector<16x128xf32>
    %cst_14 = arith.constant dense<0.000000e+00> : vector<16xf32>
    %72 = vector.multi_reduction <add>, %71, %cst_14 [1] : vector<16x128xf32> to vector<16xf32>
    %73 = vector.shape_cast %72 : vector<16xf32> to vector<16x1xf32>
    %74 = arith.subf %10, %73 : vector<16x1xf32>
    %c16_i32 = arith.constant 16 : i32
    %75 = arith.muli %arg0, %c16_i32 : i32
    %76 = tpu.iota {dimensions = array<i32: 0>} : vector<16x1xi32>
    %77 = vector.broadcast %75 : i32 to vector<16x1xi32>
    %78 = arith.addi %77, %76 : vector<16x1xi32>
    %c16_i32_15 = arith.constant 16 : i32
    %79 = vector.broadcast %c16_i32_15 : i32 to vector<16x1xi32>
    %80 = arith.cmpi slt, %78, %79 : vector<16x1xi32>
    %cst_16 = arith.constant 0.000000e+00 : f32
    %81 = vector.broadcast %cst_16 : f32 to vector<16x1xf32>
    %82 = arith.select %80, %74, %81 : vector<16x1xi1>, vector<16x1xf32>
    %cst_17 = arith.constant dense<0.000000e+00> : vector<1xf32>
    %83 = vector.multi_reduction <add>, %82, %cst_17 [0] : vector<16x1xf32> to vector<1xf32>
    %84 = vector.shape_cast %83 : vector<1xf32> to vector<1x1xf32>
    %cst_18 = arith.constant 6.250000e-02 : f32
    %85 = vector.broadcast %cst_18 : f32 to vector<1x1xf32>
    %86 = arith.mulf %84, %85 : vector<1x1xf32>
    %87 = vector.shape_cast %86 : vector<1x1xf32> to vector<1x1x1xf32>
    %88 = vector.shape_cast %87 : vector<1x1x1xf32> to vector<1x1x1xf32>
    %89 = vector.broadcast %88 : vector<1x1x1xf32> to vector<1x1x128xf32>
    %c0_19 = arith.constant 0 : index
    %c0_20 = arith.constant 0 : index
    %c0_21 = arith.constant 0 : index
    %90 = vector.load %arg3[%c0_19, %c0_20, %c0_21] : memref<1x1x128xf32, #tpu.memory_space<vmem>>, vector<1x1x128xf32>
    tpu.vector_store %arg3[%c0_19, %c0_20, %c0_21], %89 {strides = array<i32>} : memref<1x1x128xf32, #tpu.memory_space<vmem>>, vector<1x1x128xf32>,
    return
  }
  func.func @transform_0(%arg0: i32) -> (i32, i32) {
    %c0_i32 = arith.constant 0 : i32
    %c0_i32_0 = arith.constant 0 : i32
    return %arg0, %c0_i32 : i32, i32
  }
  func.func @transform_1(%arg0: i32) -> (i32, i32) {
    %c0_i32 = arith.constant 0 : i32
    %c0_i32_0 = arith.constant 0 : i32
    return %arg0, %c0_i32 : i32, i32
  }
  func.func @transform_2(%arg0: i32) -> (i32, i32, i32) {
    %c0_i32 = arith.constant 0 : i32
    %c0_i32_0 = arith.constant 0 : i32
    %c0_i32_1 = arith.constant 0 : i32
    return %arg0, %c0_i32, %c0_i32_0 : i32, i32, i32
  }
}

</mosaic_0001>

<llo_original>
// kernel: tpu_custom_call.1
$region0: #{tpu_custom_call.1}
  #allocation0 [shape = 'u32[]', space=smem, size = 0x4, offset = 0x4, fixed_abs, tag = 'smem constant byte address 0x4 - core index']
  #allocation1 [shape = 'u32[72,128]{1,0:T(1,128)}', space=vmem, size = 0x9000, scoped, tag = 'internal scratch']
  %s0 = inlined_call_operand.hbm [shape: f32[16,128], index: 0, kind: input, shape index: {}]
  %s1 = inlined_call_operand.hbm [shape: f32[16,128], index: 1, kind: input, shape index: {}]
  %s2 = inlined_call_operand.hbm [shape: f32[1,1,128], index: 2, kind: output, shape index: {}]
  %s3 = sld [smem:[#allocation0]]
  $region26: #{tpu_custom_call.1} parent=0
    _
  %s5 = ssub.s32 1, %s3
  %s6 = scalar_select 0, %s5, %s3
  $region1: #{tpu_custom_call.1} parent=0
    #allocation2 [shape = 'u8[8192]{0}', space=vmem, size = 0x2000, scoped, tag = 'input window, operand 0, single buffered']
    #allocation3 [shape = 's32[1]{0}', space=sflag, size = 0x4, scoped, tag = 'scoped memory for tpu_custom_call.1']
    #allocation4 [shape = 's32[1]{0}', space=sflag, size = 0x4, scoped, tag = 'scoped memory for tpu_custom_call.1']
    #allocation5 [shape = 'u8[8192]{0}', space=vmem, size = 0x2000, scoped, tag = 'input window, operand 1, single buffered']
    #allocation6 [shape = 's32[1]{0}', space=sflag, size = 0x4, scoped, tag = 'scoped memory for tpu_custom_call.1']
    #allocation7 [shape = 'u8[512]{0}', space=vmem, size = 0x400, scoped, tag = 'output window, operand 0, single buffered']
    %7 = vsyncpa [#allocation3], 0
    %8 = vsyncpa [#allocation6], 0
    %9 = vsyncpa [#allocation4], 0
    // Predicated region
    $region2: #{tpu_custom_call.1} parent=1 // pred_check
      _
    $region3: #{tpu_custom_call.1} parent=1 // pred_check_branch
      %11 = sbr.rel (0) target = $region5
    $region4: #{tpu_custom_call.1} parent=1 // pred_region
      %13 = vsyncadd [#allocation3], 0
      %s14 = sshll.u32 %s0, 4
      %s15 = int_to_ptr.hbm [resolvable:$true] %s14
      %s16 = sshll.u32 [#allocation2], 4
      %s17 = int_to_ptr.vmem [resolvable:$true] %s16
      %22 = dma.hbm_to_vmem [thread:$0]  %s15, 256, %s17, [#allocation3], 128, 128, 8
    $region5: #{tpu_custom_call.1} parent=1 // pred_fallthru
      _
    // Predicated region
    $region6: #{tpu_custom_call.1} parent=1 // pred_check
      _
    $region7: #{tpu_custom_call.1} parent=1 // pred_check_branch
      %24 = sbr.rel (0) target = $region9
    $region8: #{tpu_custom_call.1} parent=1 // pred_region
      %26 = vsyncadd [#allocation6], 0
      %s27 = sshll.u32 %s1, 4
      %s28 = int_to_ptr.hbm [resolvable:$true] %s27
      %s29 = sshll.u32 [#allocation5], 4
      %s30 = int_to_ptr.vmem [resolvable:$true] %s29
      %35 = dma.hbm_to_vmem [thread:$0]  %s28, 256, %s30, [#allocation6], 128, 128, 8
    $region9: #{tpu_custom_call.1} parent=1 // pred_fallthru
      _
    // Predicated region
    $region10: #{tpu_custom_call.1} parent=1 // pred_check
      _
    $region11: #{tpu_custom_call.1} parent=1 // pred_check_branch
      %37 = sbr.rel (0) target = $region13
    $region12: #{tpu_custom_call.1} parent=1 // pred_region
      %39 = dma.done [#allocation3], 256
    $region13: #{tpu_custom_call.1} parent=1 // pred_fallthru
      _
    // Predicated region
    $region14: #{tpu_custom_call.1} parent=1 // pred_check
      _
    $region15: #{tpu_custom_call.1} parent=1 // pred_check_branch
      %41 = sbr.rel (0) target = $region17
    $region16: #{tpu_custom_call.1} parent=1 // pred_region
      %43 = dma.done [#allocation6], 256
    $region17: #{tpu_custom_call.1} parent=1 // pred_fallthru
      _
    %v44 = vld [vmem:[#allocation2] sm:$0xff]
    %v45 = vld [vmem:[#allocation2 + $0x8] sm:$0xff]
    %v46 = vld [vmem:[#allocation5] sm:$0xff]
    %v47 = vld [vmem:[#allocation5 + $0x8] sm:$0xff]
    %48 = vmax.xlane.f32.xlu0 %v44
    %v49 = vpop.xlane.xlu0 %48
    %50 = vmax.xlane.f32.xlu0 %v45
    %v51 = vpop.xlane.xlu0 %50
    %v52 = vsub.f32 %v44, %v49
    %v53 = vsub.f32 %v45, %v51
    %v54 = vmul.f32 %v52, 1.442695
    %v55 = vpow.pop %v54
    %v56 = vmul.f32 %v53, 1.442695
    %v57 = vpow.pop %v56
    %58 = vadd.xlane.f32.xlu0 %v55
    %v59 = vpop.xlane.xlu0 %58
    %60 = vadd.xlane.f32.xlu0 %v57
    %v61 = vpop.xlane.xlu0 %60
    %v62 = vlog2.pop %v59
    %v63 = vmul.f32 %v62, 0.6931472
    %v64 = vlog2.pop %v61
    %v65 = vmul.f32 %v64, 0.6931472
    %v66 = vadd.f32 %v49, %v63
    %v67 = vadd.f32 %v51, %v65
    %v68 = vlaneseq
    %v69 = vand.u32 %v68, 127
    %70 = vmin.xlane.f32.xlu0 %v46
    %v71 = vpop.xlane.xlu0 %70
    %72 = vmin.xlane.f32.xlu0 %v47
    %v73 = vpop.xlane.xlu0 %72
    %vm74 = vcmp.eq.f32.partialorder %v46, %v71
    %vm75 = vcmp.eq.f32.partialorder %v47, %v73
    %v76 = vsel %vm74, %v69, 128
    %v77 = vsel %vm75, %v69, 128
    %v78 = vand.u32 %v76, 65535
    %v79 = vshra.s32 %v76, 16
    %v80 = vcvt.s32.f32 %v78
    %v81 = vcvt.s32.f32 %v79
    %82 = vmin.xlane.f32.xlu0 %v81
    %v83 = vpop.xlane.xlu0 %82
    %vm84 = vcmp.eq.f32.partialorder %v81, %v83
    %v85 = vsel %vm84, %v80, inf
    %86 = vmin.xlane.f32.xlu0 %v85
    %v87 = vpop.xlane.xlu0 %86
    %v88 = vcvt.f32.s32 %v87
    %v89 = vcvt.f32.s32 %v83
    %v90 = vshll.u32 %v89, 16
    %v91 = vadd.s32 %v90, %v88
    %v92 = vand.u32 %v77, 65535
    %v93 = vshra.s32 %v77, 16
    %v94 = vcvt.s32.f32 %v92
    %v95 = vcvt.s32.f32 %v93
    %96 = vmin.xlane.f32.xlu0 %v95
    %v97 = vpop.xlane.xlu0 %96
    %vm98 = vcmp.eq.f32.partialorder %v95, %v97
    %v99 = vsel %vm98, %v94, inf
    %100 = vmin.xlane.f32.xlu0 %v99
    %v101 = vpop.xlane.xlu0 %100
    %v102 = vcvt.f32.s32 %v101
    %v103 = vcvt.f32.s32 %v97
    %v104 = vshll.u32 %v103, 16
    %v105 = vadd.s32 %v104, %v102
    %vm106 = vcmp.eq.s32.totalorder %v69, %v91
    %vm107 = vcmp.eq.s32.totalorder %v69, %v105
    %v108 = vsel %vm106, inf, %v46
    %v109 = vsel %vm107, inf, %v47
    %110 = vmin.xlane.f32.xlu0 %v108
    %v111 = vpop.xlane.xlu0 %110
    %112 = vmin.xlane.f32.xlu0 %v109
    %v113 = vpop.xlane.xlu0 %112
    %vm114 = vcmp.eq.f32.partialorder %v108, %v111
    %vm115 = vcmp.eq.f32.partialorder %v109, %v113
    %v116 = vsel %vm114, %v69, 128
    %v117 = vsel %vm115, %v69, 128
    %v118 = vand.u32 %v116, 65535
    %v119 = vshra.s32 %v116, 16
    %v120 = vcvt.s32.f32 %v118
    %v121 = vcvt.s32.f32 %v119
    %122 = vmin.xlane.f32.xlu0 %v121
    %v123 = vpop.xlane.xlu0 %122
    %vm124 = vcmp.eq.f32.partialorder %v121, %v123
    %v125 = vsel %vm124, %v120, inf
    %126 = vmin.xlane.f32.xlu0 %v125
    %v127 = vpop.xlane.xlu0 %126
    %v128 = vcvt.f32.s32 %v127
    %v129 = vcvt.f32.s32 %v123
    %v130 = vshll.u32 %v129, 16
    %v131 = vadd.s32 %v130, %v128
    %v132 = vand.u32 %v117, 65535
    %v133 = vshra.s32 %v117, 16
    %v134 = vcvt.s32.f32 %v132
    %v135 = vcvt.s32.f32 %v133
    %136 = vmin.xlane.f32.xlu0 %v135
    %v137 = vpop.xlane.xlu0 %136
    %vm138 = vcmp.eq.f32.partialorder %v135, %v137
    %v139 = vsel %vm138, %v134, inf
    %140 = vmin.xlane.f32.xlu0 %v139
    %v141 = vpop.xlane.xlu0 %140
    %v142 = vcvt.f32.s32 %v141
    %v143 = vcvt.f32.s32 %v137
    %v144 = vshll.u32 %v143, 16
    %v145 = vadd.s32 %v144, %v142
    %vm146 = vcmp.eq.s32.totalorder %v69, %v131
    %vm147 = vcmp.eq.s32.totalorder %v69, %v145
    %v148 = vsel %vm146, inf, %v108
    %v149 = vsel %vm147, inf, %v109
    %150 = vmin.xlane.f32.xlu0 %v148
    %v151 = vpop.xlane.xlu0 %150
    %152 = vmin.xlane.f32.xlu0 %v149
    %v153 = vpop.xlane.xlu0 %152
    %vm154 = vcmp.eq.f32.partialorder %v148, %v151
    %vm155 = vcmp.eq.f32.partialorder %v149, %v153
    %v156 = vsel %vm154, %v69, 128
    %v157 = vsel %vm155, %v69, 128
    %v158 = vand.u32 %v156, 65535
    %v159 = vshra.s32 %v156, 16
    %v160 = vcvt.s32.f32 %v158
    %v161 = vcvt.s32.f32 %v159
    %162 = vmin.xlane.f32.xlu0 %v161
    %v163 = vpop.xlane.xlu0 %162
    %vm164 = vcmp.eq.f32.partialorder %v161, %v163
    %v165 = vsel %vm164, %v160, inf
    %166 = vmin.xlane.f32.xlu0 %v165
    %v167 = vpop.xlane.xlu0 %166
    %v168 = vcvt.f32.s32 %v167
    %v169 = vcvt.f32.s32 %v163
    %v170 = vshll.u32 %v169, 16
    %v171 = vadd.s32 %v170, %v168
    %v172 = vand.u32 %v157, 65535
    %v173 = vshra.s32 %v157, 16
    %v174 = vcvt.s32.f32 %v172
    %v175 = vcvt.s32.f32 %v173
    %176 = vmin.xlane.f32.xlu0 %v175
    %v177 = vpop.xlane.xlu0 %176
    %vm178 = vcmp.eq.f32.partialorder %v175, %v177
    %v179 = vsel %vm178, %v174, inf
    %180 = vmin.xlane.f32.xlu0 %v179
    %v181 = vpop.xlane.xlu0 %180
    %v182 = vcvt.f32.s32 %v181
    %v183 = vcvt.f32.s32 %v177
    %v184 = vshll.u32 %v183, 16
    %v185 = vadd.s32 %v184, %v182
    %vm186 = vcmp.eq.s32.totalorder %v69, %v171
    %vm187 = vcmp.eq.s32.totalorder %v69, %v185
    %v188 = vmax.f32 %v71, %v111
    %v189 = vmax.f32 %v73, %v113
    %v190 = vmax.f32 %v188, %v151
    %v191 = vmax.f32 %v189, %v153
    %v192 = vsub.f32 %v71, %v190
    %v193 = vsub.f32 %v73, %v191
    %v194 = vmul.f32 %v192, 1.442695
    %v195 = vpow.pop %v194
    %v196 = vmul.f32 %v193, 1.442695
    %v197 = vpow.pop %v196
    %v198 = vsub.f32 %v111, %v190
    %v199 = vsub.f32 %v113, %v191
    %v200 = vmul.f32 %v198, 1.442695
    %v201 = vpow.pop %v200
    %v202 = vmul.f32 %v199, 1.442695
    %v203 = vpow.pop %v202
    %v204 = vsub.f32 %v151, %v190
    %v205 = vsub.f32 %v153, %v191
    %v206 = vmul.f32 %v204, 1.442695
    %v207 = vpow.pop %v206
    %v208 = vmul.f32 %v205, 1.442695
    %v209 = vpow.pop %v208
    %v210 = vadd.f32 %v195, %v201
    %v211 = vadd.f32 %v197, %v203
    %v212 = vadd.f32 %v210, %v207
    %v213 = vadd.f32 %v211, %v209
    %v214 = vrcp.pop %v212
    %v215 = vmul.f32 %v212, %v214
    %v216 = vsub.f32 1.0, %v215
    %v217 = vmul.f32 %v214, %v216
    %v218 = vadd.f32 %v214, %v217
    %vm219 = vweird.f32 %v212
    %vm220 = vweird.f32 %v214
    %vm221 = vmor %vm219, %vm220
    %v222 = vsel %vm221, %v214, %v218
    %v223 = vand.u32 2147483647, %v212
    %vm224 = vcmp.eq.f32.partialorder %v223, 8.507059e+37
    %v225 = vand.u32 %v212, 2147483648
    %v226 = vor.u32 1.1754944e-38, %v225
    %v227 = vsel %vm224, %v226, %v222
    %v228 = vrcp.pop %v213
    %v229 = vmul.f32 %v213, %v228
    %v230 = vsub.f32 1.0, %v229
    %v231 = vmul.f32 %v228, %v230
    %v232 = vadd.f32 %v228, %v231
    %vm233 = vweird.f32 %v213
    %vm234 = vweird.f32 %v228
    %vm235 = vmor %vm233, %vm234
    %v236 = vsel %vm235, %v228, %v232
    %v237 = vand.u32 2147483647, %v213
    %vm238 = vcmp.eq.f32.partialorder %v237, 8.507059e+37
    %v239 = vand.u32 %v213, 2147483648
    %v240 = vor.u32 1.1754944e-38, %v239
    %v241 = vsel %vm238, %v240, %v236
    %v242 = vmul.f32 %v195, %v227
    %v243 = vmul.f32 %v197, %v241
    %v244 = vmul.f32 %v201, %v227
    %v245 = vmul.f32 %v203, %v241
    %v246 = vmul.f32 %v207, %v227
    %v247 = vmul.f32 %v209, %v241
    %v248 = vsel %vm106, %v242, 0.0
    %v249 = vsel %vm107, %v243, 0.0
    %v250 = vsel %vm146, %v244, 0.0
    %v251 = vsel %vm147, %v245, 0.0
    %v252 = vadd.f32 %v248, %v250
    %v253 = vadd.f32 %v249, %v251
    %v254 = vsel %vm186, %v246, 0.0
    %v255 = vsel %vm187, %v247, 0.0
    %v256 = vadd.f32 %v252, %v254
    %v257 = vadd.f32 %v253, %v255
    %v258 = vmul.f32 %v256, %v44
    %v259 = vmul.f32 %v257, %v45
    %260 = vadd.xlane.f32.xlu0 %v258
    %v261 = vpop.xlane.xlu0 %260
    %262 = vadd.xlane.f32.xlu0 %v259
    %v263 = vpop.xlane.xlu0 %262
    %v264 = vsub.f32 %v66, %v261
    %v265 = vsub.f32 %v67, %v263
    %s266 = smul.u32 0, 16
    %v267 = vlaneseq
    %v268 = vshrl.u32 %v267, 7
    %v269 = vadd.s32 %v268, 8
    %v270 = vstv %s266
    %v271 = vadd.s32 %v270, %v268
    %v272 = vadd.s32 %v270, %v269
    %vm273 = vcmp.lt.s32.totalorder %v271, 16
    %vm274 = vcmp.lt.s32.totalorder %v272, 16
    %v275 = vsel %vm273, %v264, 0.0
    %v276 = vsel %vm274, %v265, 0.0
    %v277 = vadd.f32 %v275, %v276
    %v278 = vrot.slane %v277, 4
    %v279 = vadd.f32 %v277, %v278
    %v280 = vrot.slane %v279, 2
    %v281 = vadd.f32 %v279, %v280
    %v282 = vrot.slane %v281, 1
    %v283 = vadd.f32 %v281, %v282
    %v284 = vmul.f32 %v283, 0.0625
    %285 = vst [vmem:[#allocation7] sm:$0x1] %v284
    // Predicated region
    $region18: #{tpu_custom_call.1} parent=1 // pred_check
      _
    $region19: #{tpu_custom_call.1} parent=1 // pred_check_branch
      %287 = sbr.rel (0) target = $region21
    $region20: #{tpu_custom_call.1} parent=1 // pred_region
      %289 = vsyncadd [#allocation4], 0
      %s291 = sshll.u32 [#allocation7], 4
      %s292 = int_to_ptr.vmem [resolvable:$true] %s291
      %s293 = sshll.u32 %s2, 4
      %s294 = int_to_ptr.hbm [resolvable:$true] %s293
      %296 = dma.vmem_to_hbm [thread:$0]  %s292, 16, %s294, [#allocation4]
    $region21: #{tpu_custom_call.1} parent=1 // pred_fallthru
      _
    // Predicated region
    $region22: #{tpu_custom_call.1} parent=1 // pred_check
      _
    $region23: #{tpu_custom_call.1} parent=1 // pred_check_branch
      %298 = sbr.rel (0) target = $region25
    $region24: #{tpu_custom_call.1} parent=1 // pred_region
      %300 = dma.done [#allocation4], 16
    $region25: #{tpu_custom_call.1} parent=1 // pred_fallthru
      _
    %301 = vsyncpa [#allocation3], 1
    %302 = vsyncpa [#allocation6], 1
    %303 = vsyncpa [#allocation4], 1

</llo_original>
